<compile_context>
chip_gen: v5e
topology: v5e:2x2
jax: 0.10.0
libtpu: 0.0.40
codegen_flags: <defaults>
</compile_context>

<pallas_src>
import functools

import jax
import jax.numpy as jnp
from jax.experimental import pallas as pl
from jax.experimental.pallas import tpu as pltpu  # noqa: F401  (TPU backend)

# (in_features, out_features) for each of the 5 Linear layers, in forward order
LAYER_DIMS = [(8, 4), (4, 16), (16, 16), (16, 4), (4, 8)]

SUB = 8       # sublane group (f32)
LANES = 128   # lane width


def _folded_affine_kernel(x_ref, p_ref, o_ref):
    """o = x @ W_fold + b_fold, all operands pre-padded to aligned VMEM tiles.

    x_ref: (8, 8)    padded input (rows >= batch are zero)
    p_ref: (16, 128) packed params: rows 0:8 = W_fold (cols >=8 zero),
                     rows 8:16 = b_fold replicated across the 8 sublanes
    o_ref: (8, 128)  lane-dense output tile (unmasked stores)
    """
    w = p_ref[0:SUB, :]         # (8, 128)
    b = p_ref[SUB:2 * SUB, :]   # (8, 128) bias already replicated per row
    o_ref[...] = (
        jnp.dot(x_ref[...], w, preferred_element_type=jnp.float32) + b
    )


def nested_wrapped_forward(x, params):
    """params: list of (W, b) with W: (in, out) f32, b: (1, out) f32."""
    batch = x.shape[0]
    in_f = LAYER_DIMS[0][0]     # 8
    out_f = LAYER_DIMS[-1][1]   # 8

    ws = [w for w, _ in params]
    bs = [b for _, b in params]

    # --- Fold the activation-free chain into one affine map (wrapper-side). ---
    w_fold = functools.reduce(jnp.matmul, ws)          # (8, 8)
    b_fold = bs[0]
    for w, b in zip(ws[1:], bs[1:]):
        b_fold = b_fold @ w + b                        # (1, 8)

    # --- Pack W_fold + b_fold into a single aligned VMEM slab. ---
    packed = jnp.zeros((2 * SUB, LANES), jnp.float32)
    packed = packed.at[0:in_f, 0:out_f].set(w_fold)
    packed = packed.at[SUB:2 * SUB, 0:out_f].set(
        jnp.broadcast_to(b_fold, (SUB, out_f)))

    # --- Pad batch 4 -> 8 (one sublane group). ---
    x_pad = jnp.zeros((SUB, in_f), jnp.float32).at[:batch, :].set(x)

    full = lambda shape: pl.BlockSpec(shape, lambda: (0,) * len(shape))

    out = pl.pallas_call(
        _folded_affine_kernel,
        out_shape=jax.ShapeDtypeStruct((SUB, LANES), jnp.float32),
        grid=(),
        in_specs=[full(x_pad.shape), full(packed.shape)],
        out_specs=full((SUB, LANES)),
        cost_estimate=pl.CostEstimate(
            flops=2 * SUB * in_f * LANES + SUB * LANES,
            transcendentals=0,
            bytes_accessed=4 * (SUB * in_f + 2 * SUB * LANES + SUB * LANES),
        ),
    )(x_pad, packed)

    # Slice back to the logical (batch, out_features) result.
    return out[:batch, :out_f]


def init_params(key):
    """Deterministic init mimicking nn.Linear's uniform(-1/sqrt(in), 1/sqrt(in))."""
    params = []
    for (fan_in, fan_out) in LAYER_DIMS:
        key, kw, kb = jax.random.split(key, 3)
        bound = 1.0 / jnp.sqrt(jnp.float32(fan_in))
        w = jax.random.uniform(kw, (fan_in, fan_out), jnp.float32, -bound, bound)
        b = jax.random.uniform(kb, (1, fan_out), jnp.float32, -bound, bound)
        params.append((w, b))
    return params


def reference_forward(x, params):
    """Layer-by-layer reference (unfolded) to validate semantics."""
    h = x
    for w, b in params:
        h = h @ w + b
    return h


if __name__ == "__main__":
    key = jax.random.PRNGKey(0)
    key, kx = jax.random.split(key)
    # get_input() returns torch.rand(4, 8) -> uniform [0,1), shape (4, 8)
    x = jax.random.uniform(kx, (4, 8), jnp.float32)
    params = init_params(key)

    out = nested_wrapped_forward(x, params)
    out = jax.block_until_ready(out)

    ref = reference_forward(x, params)
    assert out.shape == (4, 8), out.shape
    # Folding re-associates f32 ops; difference is ~1e-6, well within tolerance.
    assert jnp.allclose(out, ref, atol=2e-5, rtol=1e-5), "mismatch vs JAX reference"

    print("KERNEL_OK")
</pallas_src>

<mosaic_0001>
module attributes {stable_mosaic.version = 11 : i64} {
  func.func @_folded_affine_kernel(%arg0: memref<8x8xf32, #tpu.memory_space<vmem>>, %arg1: memref<16x128xf32, #tpu.memory_space<vmem>>, %arg2: memref<8x128xf32, #tpu.memory_space<vmem>>) attributes {dimension_semantics = [], scalar_prefetch = 0 : i64, scratch_operands = 0 : i64, tpu.core_type = #tpu.core_type<tc>} {
    %c0 = arith.constant 0 : index
    %c0_0 = arith.constant 0 : index
    %0 = vector.load %arg1[%c0, %c0_0] : memref<16x128xf32, #tpu.memory_space<vmem>>, vector<8x128xf32>
    %c8 = arith.constant 8 : index
    %c0_1 = arith.constant 0 : index
    %1 = vector.load %arg1[%c8, %c0_1] : memref<16x128xf32, #tpu.memory_space<vmem>>, vector<8x128xf32>
    %c0_2 = arith.constant 0 : index
    %c0_3 = arith.constant 0 : index
    %2 = vector.load %arg0[%c0_2, %c0_3] : memref<8x8xf32, #tpu.memory_space<vmem>>, vector<8x8xf32>
    %cst = arith.constant dense<0.000000e+00> : vector<8x128xf32>
    %3 = tpu.matmul %2, %0, %cst {dimension_numbers = #tpu.dot_dimension_numbers<[1], [0], [0], [1], [0, 0, 1, 1], [], []>} : vector<8x8xf32>, vector<8x128xf32>, vector<8x128xf32> -> vector<8x128xf32>
    %4 = arith.addf %3, %1 : vector<8x128xf32>
    %c0_4 = arith.constant 0 : index
    %c0_5 = arith.constant 0 : index
    %5 = vector.load %arg2[%c0_4, %c0_5] : memref<8x128xf32, #tpu.memory_space<vmem>>, vector<8x128xf32>
    tpu.vector_store %arg2[%c0_4, %c0_5], %4 {strides = array<i32>} : memref<8x128xf32, #tpu.memory_space<vmem>>, vector<8x128xf32>,
    return
  }
}

</mosaic_0001>

<llo_original>
// kernel: tpu_custom_call.1
$region0: #{tpu_custom_call.1}
  #allocation0 [shape = 'u32[]', space=smem, size = 0x4, offset = 0x4, fixed_abs, tag = 'smem constant byte address 0x4 - core index']
  #allocation1 [shape = 'u32[72,128]{1,0:T(1,128)}', space=vmem, size = 0x9000, scoped, tag = 'internal scratch']
  %s0 = inlined_call_operand.hbm [shape: f32[8,8], index: 0, kind: input, shape index: {}]
  %s1 = inlined_call_operand.hbm [shape: f32[16,128], index: 1, kind: input, shape index: {}]
  %s2 = inlined_call_operand.hbm [shape: f32[8,128], index: 2, kind: output, shape index: {}]
  %s3 = sld [smem:[#allocation0]]
  $region26: #{tpu_custom_call.1} parent=0
    _
  %s5 = ssub.s32 1, %s3
  %s6 = scalar_select 0, %s5, %s3
  $region1: #{tpu_custom_call.1} parent=0
    #allocation2 [shape = 'u8[4096]{0}', space=vmem, size = 0x1000, scoped, tag = 'input window, operand 0, single buffered']
    #allocation3 [shape = 's32[1]{0}', space=sflag, size = 0x4, scoped, tag = 'scoped memory for tpu_custom_call.1']
    #allocation4 [shape = 's32[1]{0}', space=sflag, size = 0x4, scoped, tag = 'scoped memory for tpu_custom_call.1']
    #allocation5 [shape = 'u8[8192]{0}', space=vmem, size = 0x2000, scoped, tag = 'input window, operand 1, single buffered']
    #allocation6 [shape = 's32[1]{0}', space=sflag, size = 0x4, scoped, tag = 'scoped memory for tpu_custom_call.1']
    #allocation7 [shape = 'u8[4096]{0}', space=vmem, size = 0x1000, scoped, tag = 'output window, operand 0, single buffered']
    %7 = vsyncpa [#allocation3], 0
    %8 = vsyncpa [#allocation6], 0
    %9 = vsyncpa [#allocation4], 0
    // Predicated region
    $region2: #{tpu_custom_call.1} parent=1 // pred_check
      _
    $region3: #{tpu_custom_call.1} parent=1 // pred_check_branch
      %11 = sbr.rel (0) target = $region5
    $region4: #{tpu_custom_call.1} parent=1 // pred_region
      %13 = vsyncadd [#allocation3], 0
      %s15 = sshll.u32 %s0, 4
      %s16 = int_to_ptr.hbm [resolvable:$true] %s15
      %s17 = sshll.u32 [#allocation2], 4
      %s18 = int_to_ptr.vmem [resolvable:$true] %s17
      %20 = dma.hbm_to_vmem [thread:$0]  %s16, 128, %s18, [#allocation3]
    $region5: #{tpu_custom_call.1} parent=1 // pred_fallthru
      _
    // Predicated region
    $region6: #{tpu_custom_call.1} parent=1 // pred_check
      _
    $region7: #{tpu_custom_call.1} parent=1 // pred_check_branch
      %22 = sbr.rel (0) target = $region9
    $region8: #{tpu_custom_call.1} parent=1 // pred_region
      %24 = vsyncadd [#allocation6], 0
      %s25 = sshll.u32 %s1, 4
      %s26 = int_to_ptr.hbm [resolvable:$true] %s25
      %s27 = sshll.u32 [#allocation5], 4
      %s28 = int_to_ptr.vmem [resolvable:$true] %s27
      %33 = dma.hbm_to_vmem [thread:$0]  %s26, 256, %s28, [#allocation6], 128, 128, 8
    $region9: #{tpu_custom_call.1} parent=1 // pred_fallthru
      _
    // Predicated region
    $region10: #{tpu_custom_call.1} parent=1 // pred_check
      _
    $region11: #{tpu_custom_call.1} parent=1 // pred_check_branch
      %35 = sbr.rel (0) target = $region13
    $region12: #{tpu_custom_call.1} parent=1 // pred_region
      %37 = dma.done [#allocation3], 128
    $region13: #{tpu_custom_call.1} parent=1 // pred_fallthru
      _
    // Predicated region
    $region14: #{tpu_custom_call.1} parent=1 // pred_check
      _
    $region15: #{tpu_custom_call.1} parent=1 // pred_check_branch
      %39 = sbr.rel (0) target = $region17
    $region16: #{tpu_custom_call.1} parent=1 // pred_region
      %41 = dma.done [#allocation6], 256
    $region17: #{tpu_custom_call.1} parent=1 // pred_fallthru
      _
    %v42 = vld [vmem:[#allocation5] sm:$0xff]
    %v43 = vld [vmem:[#allocation5 + $0x8] sm:$0xff]
    %v44 = vld [vmem:[#allocation2] sm:$0xff]
    %vm45 = vcmask 64512
    %v47 = vsel %vm45, %v44, 0
    %49 = vmatpush.msra.mxu0 0.0
    %50 = vmatpush.msra.mxu0 0.0
    %51 = vmatpush.msra.mxu0 0.0
    %52 = vmatpush.msra.mxu0 0.0
    %53 = vmatpush.msra.mxu0 0.0
    %54 = vmatpush.msra.mxu0 0.0
    %55 = vmatpush.msra.mxu0 0.0
    %56 = vmatpush.msra.mxu0 0.0
    %57 = vmatpush.msra.mxu0 0.0
    %58 = vmatpush.msra.mxu0 0.0
    %59 = vmatpush.msra.mxu0 0.0
    %60 = vmatpush.msra.mxu0 0.0
    %61 = vmatpush.msra.mxu0 0.0
    %62 = vmatpush.msra.mxu0 0.0
    %63 = vmatpush.msra.mxu0 0.0
    %64 = vmatpush.msra.mxu0 %v42
    %65 = vmatmul.f32.gmra.mxu0 %v47
    %v66 = vpop.f32.mrf.mxu0
    %v67 = vadd.f32 %v43, %v66
    %68 = vdwg.mxu0
    %69 = vst [vmem:[#allocation7] sm:$0xff] %v67
    // Predicated region
    $region18: #{tpu_custom_call.1} parent=1 // pred_check
      _
    $region19: #{tpu_custom_call.1} parent=1 // pred_check_branch
      %71 = sbr.rel (0) target = $region21
    $region20: #{tpu_custom_call.1} parent=1 // pred_region
      %73 = vsyncadd [#allocation4], 0
      %s75 = sshll.u32 [#allocation7], 4
      %s76 = int_to_ptr.vmem [resolvable:$true] %s75
      %s77 = sshll.u32 %s2, 4
      %s78 = int_to_ptr.hbm [resolvable:$true] %s77
      %80 = dma.vmem_to_hbm [thread:$0]  %s76, 128, %s78, [#allocation4]
    $region21: #{tpu_custom_call.1} parent=1 // pred_fallthru
      _
    // Predicated region
    $region22: #{tpu_custom_call.1} parent=1 // pred_check
      _
    $region23: #{tpu_custom_call.1} parent=1 // pred_check_branch
      %82 = sbr.rel (0) target = $region25
    $region24: #{tpu_custom_call.1} parent=1 // pred_region
      %84 = dma.done [#allocation4], 128
    $region25: #{tpu_custom_call.1} parent=1 // pred_fallthru
      _
    %85 = vsyncpa [#allocation3], 1
    %86 = vsyncpa [#allocation6], 1
    %87 = vsyncpa [#allocation4], 1

</llo_original>
